<compile_context>
chip_gen: v7x
topology: tpu7x:2x2x1
jax: 0.10.0
libtpu: 0.0.40
codegen_flags: <defaults>
</compile_context>

<pallas_src>
import jax
import jax.numpy as jnp
from jax.experimental import pallas as pl
from jax.experimental.pallas import tpu as pltpu


def _copy_kernel(x_ref, o_ref):
    # Strided-DMA path: the BlockSpec already selected the kept rows in HBM.
    o_ref[...] = x_ref[...]


def _select_plane_kernel(x_ref, o_ref):
    # Fallback path: x_ref is (1, T, factor, H); keep phase 0 of every group.
    o_ref[...] = x_ref[:, :, 0, :]


def _round_up(a: int, m: int) -> int:
    return -(-a // m) * m


def downsampling(x: jax.Array, factor: int, *, rows_per_tile=None) -> jax.Array:
    """Pallas implementation of Downsampling.forward: x[:, ::factor, :]."""
    assert factor >= 1
    B, S, H = x.shape
    dtype = x.dtype
    itemsize = dtype.itemsize
    # dtype-dependent sublane packing (f32: 8, bf16: 16, int8/fp8: 32)
    sublane = {4: 8, 2: 16, 1: 32}.get(itemsize, 8)

    S_out = -(-S // factor)           # ceil(S / factor) == len(range(0, S, factor))
    S_pad = S_out * factor
    if S_pad != S:
        # Pad the ragged tail; padded rows are never selected because the last
        # kept row index is (S_out - 1) * factor <= S - 1.
        x = jnp.pad(x, ((0, 0), (0, S_pad - S), (0, 0)))

    lane = _round_up(H, 128)

    # Strided-DMA path is legal only when the input block's last dim (H) is a
    # multiple of 128 (or factor == 1, in which case it is a plain copy).
    strided_dma = (factor == 1) or (H % 128 == 0)

    if strided_dma:
        x_r = x.reshape(B, S_out, factor * H)
        in_row_bytes = lane * itemsize                               # only kept bytes move
        kernel = _copy_kernel
        read_bytes = B * S_out * H * itemsize
    else:
        x_r = x.reshape(B, S_out, factor, H)
        in_row_bytes = _round_up(factor, sublane) * lane * itemsize  # VMEM-padded group
        kernel = _select_plane_kernel
        read_bytes = B * S_pad * H * itemsize

    out_row_bytes = lane * itemsize
    write_bytes = B * S_out * H * itemsize

    if rows_per_tile is None:
        # ~4 MiB of (input + output) block per pipeline stage -> ~8 MiB with
        # double buffering: comfortably inside the scoped-VMEM defaults on
        # v5e / v6e and v7x's smaller 64 MiB VMEM, while big enough to
        # amortize the ~0.35 us per-grid-step overhead.
        budget = 4 * 1024 * 1024
        t = budget // max(in_row_bytes + out_row_bytes, 1)
        t = max(sublane, (t // sublane) * sublane)   # sublane-aligned seq tile
        rows_per_tile = S_out if t >= S_out else t
    T = rows_per_tile

    num_seq_tiles = -(-S_out // T)

    if strided_dma:
        in_spec = pl.BlockSpec((1, T, H), lambda b, s: (b, s, 0))
    else:
        in_spec = pl.BlockSpec((1, T, factor, H), lambda b, s: (b, s, 0, 0))
    out_spec = pl.BlockSpec((1, T, H), lambda b, s: (b, s, 0))

    # TODO(synk): for H < 128 a wrapper-side collapse of (T, H) into one
    # lane-dense last dim could remove masked vst.msk stores; second-order here.
    return pl.pallas_call(
        kernel,
        out_shape=jax.ShapeDtypeStruct((B, S_out, H), dtype),
        grid=(B, num_seq_tiles),
        in_specs=[in_spec],
        out_specs=out_spec,
        compiler_params=pltpu.CompilerParams(
            dimension_semantics=("parallel", "parallel")),
        cost_estimate=pl.CostEstimate(
            flops=0, transcendentals=0,
            bytes_accessed=read_bytes + write_bytes),
    )(x_r)


if __name__ == "__main__":
    key = jax.random.PRNGKey(0)

    # (B, S, H, factor, rows_per_tile) -- small shapes; exercises both DMA
    # paths, ragged tails (S % factor != 0) and multi-tile sequence grids.
    cases = [
        (2, 8, 32, 2, None),    # module-default shape: fallback (contiguous DMA + static slice)
        (2, 9, 32, 2, None),    # ragged tail
        (2, 40, 32, 4, 8),      # fallback path, multiple seq tiles + partial boundary tile
        (2, 64, 128, 2, None),  # lane-aligned H: strided-DMA pure-copy path
        (2, 34, 128, 3, 8),     # strided-DMA path, ragged tail + seq tiling
    ]

    for i, (B, S, H, factor, rpt) in enumerate(cases):
        key, sub = jax.random.split(key)
        x = jax.random.normal(sub, (B, S, H), dtype=jnp.float32)
        out = jax.block_until_ready(downsampling(x, factor, rows_per_tile=rpt))
        ref = x[:, ::factor, :]
        assert out.shape == ref.shape, (i, out.shape, ref.shape)
        assert jnp.array_equal(out, ref), f"Pallas downsampling mismatch (case {i})"

    print("KERNEL_OK")
</pallas_src>

<mosaic_0001>
module attributes {stable_mosaic.version = 11 : i64} {
  func.func @_select_plane_kernel(%arg0: i32, %arg1: i32, %arg2: memref<1x4x2x32xf32, #tpu.memory_space<vmem>>, %arg3: memref<1x4x32xf32, #tpu.memory_space<vmem>>) attributes {dimension_semantics = [#tpu.dimension_semantics<parallel>, #tpu.dimension_semantics<parallel>], iteration_bounds = array<i64: 2, 1>, scalar_prefetch = 0 : i64, scratch_operands = 0 : i64, tpu.core_type = #tpu.core_type<tc>, window_params = [{transform_indices = @transform_0, window_bounds = array<i64: 1, 4, 2, 32>}, {transform_indices = @transform_1, window_bounds = array<i64: 1, 4, 32>}]} {
    %c0 = arith.constant 0 : index
    %c0_0 = arith.constant 0 : index
    %c0_1 = arith.constant 0 : index
    %c0_2 = arith.constant 0 : index
    %0 = vector.load %arg2[%c0, %c0_0, %c0_1, %c0_2] : memref<1x4x2x32xf32, #tpu.memory_space<vmem>>, vector<1x4x1x32xf32>
    %1 = vector.shape_cast %0 : vector<1x4x1x32xf32> to vector<1x4x32xf32>
    %c0_3 = arith.constant 0 : index
    %c0_4 = arith.constant 0 : index
    %c0_5 = arith.constant 0 : index
    %2 = vector.load %arg3[%c0_3, %c0_4, %c0_5] : memref<1x4x32xf32, #tpu.memory_space<vmem>>, vector<1x4x32xf32>
    tpu.vector_store %arg3[%c0_3, %c0_4, %c0_5], %1 {strides = array<i32>} : memref<1x4x32xf32, #tpu.memory_space<vmem>>, vector<1x4x32xf32>,
    return
  }
  func.func @transform_0(%arg0: i32, %arg1: i32) -> (i32, i32, i32, i32) {
    %c0_i32 = arith.constant 0 : i32
    %c0_i32_0 = arith.constant 0 : i32
    %c0_i32_1 = arith.constant 0 : i32
    return %arg0, %arg1, %c0_i32, %c0_i32_0 : i32, i32, i32, i32
  }
  func.func @transform_1(%arg0: i32, %arg1: i32) -> (i32, i32, i32) {
    %c0_i32 = arith.constant 0 : i32
    %c0_i32_0 = arith.constant 0 : i32
    return %arg0, %arg1, %c0_i32 : i32, i32, i32
  }
}

</mosaic_0001>

<llo_original>
// kernel: tpu_custom_call.1
$region0: #{tpu_custom_call.1}
  #allocation0 [shape = 'u32[]', space=smem, size = 0x4, offset = 0x4, fixed_abs, tag = 'smem constant byte address 0x4 - core index']
  #allocation1 [shape = 'u32[144,128]{1,0:T(1,128)}', space=vmem, size = 0x12000, scoped, tag = 'internal scratch']
  %s0 = inlined_call_operand.hbm [shape: f32[2,4,2,32], index: 0, kind: input, shape index: {}]
  %s1 = inlined_call_operand.hbm [shape: f32[2,4,32], index: 1, kind: output, shape index: {}]
  %s2 = sld [smem:[#allocation0]]
  $region41: #{tpu_custom_call.1} parent=0
    _
  %s4 = ssub.s32 1, %s2
  %s5 = scalar_select 0, %s4, %s2
  $region1: #{tpu_custom_call.1} parent=0
    #allocation2 [shape = 'u8[8192]{0}', space=vmem, size = 0x2000, scoped, tag = 'input window, operand 0']
    #allocation3 [shape = 's32[2]{0}', space=sflag, size = 0x8, scoped, tag = 'scoped memory for tpu_custom_call.1']
    #allocation4 [shape = 's32[2]{0}', space=sflag, size = 0x8, scoped, tag = 'scoped memory for tpu_custom_call.1']
    #allocation5 [shape = 'u8[4096]{0}', space=vmem, size = 0x1000, scoped, tag = 'output window, operand 0']
    %6 = vsyncpa [#allocation3], 0
    %s7 = scalar_lea.sflag [#allocation3], 1
    %8 = vsyncpa %s7, 0
    %9 = vsyncpa [#allocation4], 0
    %s10 = scalar_lea.sflag [#allocation4], 1
    %11 = vsyncpa %s10, 0
    loop: start=0, step=1, limit=4
    $region2: #{tpu_custom_call.1} parent=1 // loop_pre_header
      _
    $region3: #{tpu_custom_call.1} parent=1 // loop_header
      %s13 = sphi 0, %s17
      %p14 = scmp.ge.s32.totalorder %s13, 4
      %s20 = sphi 0, %s32
      %s21 = sphi 0, %s28
      %s22 = sphi 0, %s20
      %s23 = sphi 0, %s21
      %s24 = sphi 0, %s22
      %s25 = sphi 0, %s23
      %s37 = sphi 0, %s39
      %s40 = sphi 0, %s37
      %s41 = sphi 0, %s40
      %s57 = sphi 0, %s41
      %s65 = sphi 0, %s67
      %s68 = sphi 0, %s65
      %s69 = sphi 0, %s68
      %s85 = sphi 0, %s69
    $region4: #{tpu_custom_call.1} parent=1 // loop_header_branch
      %16 = sbr.rel (%p14) target = $region8
    $region5: #{tpu_custom_call.1} parent=1 // loop_body
      %s18 = ssub.s32 %s13, 1
      %s19 = ssub.s32 %s13, 2
      %s26 = sadd.s32 1, %s21
      %p27 = scmp.ge.s32.totalorder %s26, 1
      %s28 = scalar_select %p27, 0, %s26
      %s29 = sadd.s32 1, %s20
      %s30 = scalar_select %p27, %s29, %s20
      %p31 = scmp.ge.s32.totalorder %s30, 2
      %s32 = scalar_select %p31, 0, %s30
      %s33 = ssub.s32 %s20, %s32
      %s34 = ssub.s32 %s21, %s28
      %s35 = sor.u32 %s33, %s34
      %p36 = scmp.eq.s32.totalorder %s35, 0
      %s38 = sadd.s32 %s37, 1
      %s39 = scalar_select %p36, %s37, %s38
      %p42 = pneg %p36
      %p43 = scmp.eq.s32.totalorder %s13, 1
      %p44 = por %p42, %p43
      %p45 = scmp.ne.s32.totalorder %s37, %s40
      %p46 = scmp.eq.s32.totalorder %s13, 0
      %p47 = por %p45, %p46
      %p48 = scmp.ne.s32.totalorder %s37, %s40
      %p49 = scmp.eq.s32.totalorder %s18, 1
      %p50 = por %p48, %p49
      %p51 = scmp.ne.s32.totalorder %s40, %s41
      %p52 = scmp.eq.s32.totalorder %s18, 0
      %p53 = por %p51, %p52
      %p54 = scmp.ne.s32.totalorder %s40, %s41
      %p55 = scmp.eq.s32.totalorder %s19, 1
      %p56 = por %p54, %p55
      %p58 = scmp.ne.s32.totalorder %s41, %s57
      %p59 = scmp.eq.s32.totalorder %s19, 0
      %p60 = por %p58, %p59
      %s61 = ssub.s32 %s20, %s32
      %s62 = ssub.s32 %s21, %s28
      %s63 = sor.u32 %s61, %s62
      %p64 = scmp.eq.s32.totalorder %s63, 0
      %s66 = sadd.s32 %s65, 1
      %s67 = scalar_select %p64, %s65, %s66
      %p70 = pneg %p64
      %p71 = scmp.eq.s32.totalorder %s13, 1
      %p72 = por %p70, %p71
      %p73 = scmp.ne.s32.totalorder %s65, %s68
      %p74 = scmp.eq.s32.totalorder %s13, 0
      %p75 = por %p73, %p74
      %p76 = scmp.ne.s32.totalorder %s65, %s68
      %p77 = scmp.eq.s32.totalorder %s18, 1
      %p78 = por %p76, %p77
      %p79 = scmp.ne.s32.totalorder %s68, %s69
      %p80 = scmp.eq.s32.totalorder %s18, 0
      %p81 = por %p79, %p80
      %p82 = scmp.ne.s32.totalorder %s68, %s69
      %p83 = scmp.eq.s32.totalorder %s19, 1
      %p84 = por %p82, %p83
      %p86 = scmp.ne.s32.totalorder %s69, %s85
      %p87 = scmp.eq.s32.totalorder %s19, 0
      %p88 = por %p86, %p87
      %p89 = scmp.le.s32.totalorder 1, %s13
      %p90 = scmp.lt.s32.totalorder %s13, 3
      %p91 = pnand %p89, %p90
      %p92 = pneg %p91
      // Predicated region
      $region9: #{tpu_custom_call.1} parent=5 // pred_check
        _
      $region10: #{tpu_custom_call.1} parent=5 // pred_check_branch
        %94 = sbr.rel (%p91) target = $region12
      $region11: #{tpu_custom_call.1} parent=5 // pred_region
        %s95 = ssub.s32 %s13, 1
      $region12: #{tpu_custom_call.1} parent=5 // pred_fallthru
        _
      %p96 = scmp.lt.s32.totalorder %s13, 2
      // Predicated region
      $region13: #{tpu_custom_call.1} parent=5 // pred_check
        %p97 = pneg %p96
      $region14: #{tpu_custom_call.1} parent=5 // pred_check_branch
        %99 = sbr.rel (%p97) target = $region16
      $region15: #{tpu_custom_call.1} parent=5 // pred_region
        // Predicated region
        $region17: #{tpu_custom_call.1} parent=15 // pred_check
          %p100 = pneg %p47
        $region18: #{tpu_custom_call.1} parent=15 // pred_check_branch
          %102 = sbr.rel (%p100) target = $region20
        $region19: #{tpu_custom_call.1} parent=15 // pred_region
          %s103 = sand.u32 %s37, 1
          %s104 = scalar_lea.sflag [#allocation3], %s103
          %s105 = sand.u32 %s37, 1
          %s106 = smul.addr %s105, 8
          %s107 = scalar_lea.vmem [#allocation2], %s106
          %s108 = smul.u32 4, %s21
          %s110 = ssub.s32 128, 128
          %111 = vsyncadd %s104, %s110
          %s112 = smul.addr %s20, 4
          %s113 = sadd.s32 %s108, %s112
          %s114 = smul.addr %s113, 32
          %s115 = scalar_lea.hbm %s0, %s114
          %s116 = sshll.u32 %s107, 4
          %s117 = int_to_ptr.vmem [resolvable:$true] %s116
          %122 = dma.hbm_to_vmem [thread:$0]  %s115, 128, %s117, %s104, 32, 32, 2
        $region20: #{tpu_custom_call.1} parent=15 // pred_fallthru
          _
      $region16: #{tpu_custom_call.1} parent=5 // pred_fallthru
        _
      %p123 = scmp.le.s32.totalorder 1, %s13
      %p124 = scmp.lt.s32.totalorder %s13, 3
      %p125 = pnand %p123, %p124
      %p126 = pneg %p125
      // Predicated region
      $region21: #{tpu_custom_call.1} parent=5 // pred_check
        _
      $region22: #{tpu_custom_call.1} parent=5 // pred_check_branch
        %128 = sbr.rel (%p125) target = $region24
      $region23: #{tpu_custom_call.1} parent=5 // pred_region
        %s129 = ssub.s32 %s13, 1
        %s130 = sand.u32 %s40, 1
        %s131 = scalar_lea.sflag [#allocation3], %s130
        %s132 = sand.u32 %s40, 1
        %s133 = smul.addr %s132, 8
        %s134 = scalar_lea.vmem [#allocation2], %s133
        // Predicated region
        $region25: #{tpu_custom_call.1} parent=23 // pred_check
          %p135 = pneg %p53
        $region26: #{tpu_custom_call.1} parent=23 // pred_check_branch
          %137 = sbr.rel (%p135) target = $region28
        $region27: #{tpu_custom_call.1} parent=23 // pred_region
          %138 = dma.done %s131, 128
        $region28: #{tpu_custom_call.1} parent=23 // pred_fallthru
          _
        %s139 = sand.u32 %s40, 1
        %s140 = scalar_lea.sflag [#allocation3], %s139
        %s141 = sand.u32 %s40, 1
        %s142 = smul.addr %s141, 8
        %s143 = scalar_lea.vmem [#allocation2], %s142
        %p144 = pneg %p53
        %p145 = pneg %p50
        %p146 = pneg %p81
        %p147 = pneg %p78
        %s148 = sand.u32 %s68, 1
        %s149 = scalar_lea.sflag [#allocation4], %s148
        %s150 = sand.u32 %s68, 1
        %s151 = smul.addr %s150, 4
        %s152 = scalar_lea.vmem [#allocation5], %s151
        %s153 = smul.u32 4, %s23
        %v154 = vld [vmem:[%s134] sm:$0x1]
        %v155 = vld [vmem:[%s134 + $0x2] sm:$0x1]
        %v156 = vld [vmem:[%s134 + $0x4] sm:$0x1]
        %v157 = vld [vmem:[%s134 + $0x6] sm:$0x1]
        %v162 = vrot.slane %v155, 7
        %vm163 = vcmask 1041409
        %v164 = vsel %vm163, %v162, %v154
        %v165 = vrot.slane %v156, 6
        %vm166 = vcmask 1042434
        %v167 = vsel %vm166, %v165, %v164
        %v168 = vrot.slane %v157, 5
        %vm169 = vcmask 1043459
        %v170 = vsel %vm169, %v168, %v167
        %vm172 = vcmask 257024
        %173 = vst.msk [vmem:[%s152] sm:$0xf] %vm172, %v170
        %s174 = sand.u32 %s68, 1
        %s175 = scalar_lea.sflag [#allocation4], %s174
        %s176 = sand.u32 %s68, 1
        %s177 = smul.addr %s176, 4
        %s178 = scalar_lea.vmem [#allocation5], %s177
        // Predicated region
        $region29: #{tpu_custom_call.1} parent=23 // pred_check
          %p179 = pneg %p78
        $region30: #{tpu_custom_call.1} parent=23 // pred_check_branch
          %181 = sbr.rel (%p179) target = $region32
        $region31: #{tpu_custom_call.1} parent=23 // pred_region
          %s183 = ssub.s32 64, 64
          %184 = vsyncadd %s175, %s183
          %s185 = sadd.s32 %s23, %s22
          %s186 = smul.addr %s185, 64
          %s187 = scalar_lea.hbm %s1, %s186
          %s189 = sshll.u32 %s178, 4
          %s190 = int_to_ptr.vmem [resolvable:$true] %s189
          %192 = dma.vmem_to_hbm [thread:$0]  %s190, 64, %s187, %s175
        $region32: #{tpu_custom_call.1} parent=23 // pred_fallthru
          _
      $region24: #{tpu_custom_call.1} parent=5 // pred_fallthru
        _
      %p193 = scmp.le.s32.totalorder 2, %s13
      // Predicated region
      $region33: #{tpu_custom_call.1} parent=5 // pred_check
        %p194 = pneg %p193
      $region34: #{tpu_custom_call.1} parent=5 // pred_check_branch
        %196 = sbr.rel (%p194) target = $region36
      $region35: #{tpu_custom_call.1} parent=5 // pred_region
        %s197 = ssub.s32 %s13, 2
        // Predicated region
        $region37: #{tpu_custom_call.1} parent=35 // pred_check
          %p198 = pneg %p84
        $region38: #{tpu_custom_call.1} parent=35 // pred_check_branch
          %200 = sbr.rel (%p198) target = $region40
        $region39: #{tpu_custom_call.1} parent=35 // pred_region
          %s201 = sand.u32 %s69, 1
          %s202 = scalar_lea.sflag [#allocation4], %s201
          %s203 = sand.u32 %s69, 1
          %s204 = smul.addr %s203, 4
          %s205 = scalar_lea.vmem [#allocation5], %s204
          %206 = dma.done %s202, 64
        $region40: #{tpu_custom_call.1} parent=35 // pred_fallthru
          _
      $region36: #{tpu_custom_call.1} parent=5 // pred_fallthru
        _
    $region6: #{tpu_custom_call.1} parent=1 // loop_footer
      %s17 = sadd.s32 1, %s13
    $region7: #{tpu_custom_call.1} parent=1 // loop_footer_branch
      %12 = sbr.rel target = $region3
    $region8: #{tpu_custom_call.1} parent=1 // loop_exit
      _
    %207 = vsyncpa [#allocation3], 1
    %s208 = scalar_lea.sflag [#allocation3], 1
    %209 = vsyncpa %s208, 1
    %210 = vsyncpa [#allocation4], 1
    %s211 = scalar_lea.sflag [#allocation4], 1
    %212 = vsyncpa %s211, 1

</llo_original>
